<compile_context>
chip_gen: v7x
topology: tpu7x:2x2x1
jax: 0.10.0
libtpu: 0.0.40
codegen_flags: <defaults>
</compile_context>

<pallas_src>
import jax
import jax.numpy as jnp
from jax.experimental import pallas as pl
from jax.experimental.pallas import tpu as pltpu


def _wsum_kernel(c_ref, x_ref, o_ref):
    # c_ref: (d0, 1, bF)    f32 softmax coefficients (already broadcast along d4)
    # x_ref: (d0, bd1, bF)  data tile
    # o_ref: (bd1, bF)      output tile
    d0 = x_ref.shape[0]
    acc = c_ref[0].astype(jnp.float32) * x_ref[0].astype(jnp.float32)
    for k in range(1, d0):  # d0 is small & static: unrolled VPU MAC chain
        acc = acc + c_ref[k].astype(jnp.float32) * x_ref[k].astype(jnp.float32)
    o_ref[...] = acc.astype(o_ref.dtype)


def _divisor_multiple(n, align, cap):
    """Largest d with d | n, d % align == 0, d <= cap.  None if no such d."""
    best = None
    cap = min(n, cap)
    for cand in range(align, cap + 1, align):
        if n % cand == 0:
            best = cand
    return best


def _chip_tuning():
    """Generation-specific tile / VMEM / pipelining settings."""
    try:
        vmem = pltpu.get_tpu_info().vmem_capacity_bytes
    except Exception:
        # Unknown part: conservative defaults.
        return dict(target_block_bytes=2 << 20, vmem_limit=32 << 20,
                    data_buffers=2, two_tc=False)
    if vmem <= (96 << 20):
        # v7x-class: 64 MiB VMEM, 2 TensorCores, ~2.3x v6e HBM bandwidth.
        return dict(target_block_bytes=3 << 20, vmem_limit=48 << 20,
                    data_buffers=3, two_tc=True)
    # v5e/v6e-class: 128 MiB VMEM, single TensorCore.
    return dict(target_block_bytes=6 << 20, vmem_limit=64 << 20,
                data_buffers=2, two_tc=False)


def weighted_sum_pallas(data3, cflat, out_dtype):
    """out[r, f] = sum_k cflat[k, 0, f] * data3[k, r, f]."""
    d0, d1, F = data3.shape
    itemsize = jnp.dtype(data3.dtype).itemsize
    coef_itemsize = jnp.dtype(cflat.dtype).itemsize
    tune = _chip_tuning()
    target_block_bytes = tune["target_block_bytes"]

    # ---- Feature (F) block first: maximize DMA contiguity / lane density. ----
    # Smallest legal row block used only for sizing bF.
    bd1_min = 8 if (d1 % 8 == 0 and d1 >= 8) else d1
    if F % 128 != 0 or d0 * bd1_min * F * itemsize <= target_block_bytes:
        bF = F                                    # whole feature axis, contiguous
    else:
        cap_elems = max(128, target_block_bytes // (itemsize * d0 * bd1_min))
        bF = _divisor_multiple(F, 128, cap_elems) or F

    # ---- Row (d1) block from the remaining budget. ----
    if d1 % 8 != 0 or d1 < 8:
        bd1 = d1                                  # full dim (valid per (8,128) rule)
    else:
        cap_rows = max(8, target_block_bytes // (itemsize * d0 * bF))
        bd1 = _divisor_multiple(d1, 8, cap_rows) or d1

    # ---- v7x megacore: >= 4 balanced steps, created by splitting d1 only. ----
    if tune["two_tc"]:
        steps = (F // bF) * (d1 // bd1)
        if steps < 4 and d1 % 8 == 0 and d1 >= 32:
            cand = _divisor_multiple(d1, 8, d1 // 4)
            if cand is not None:
                bd1 = cand
    # (On single-TC parts we deliberately do NOT force extra grid steps.)

    nF, nd1 = F // bF, d1 // bd1
    total_steps = nF * nd1

    # Deeper buffering on the data stream only where it can actually overlap.
    data_pipeline_mode = None
    if tune["data_buffers"] > 2 and total_steps >= tune["data_buffers"]:
        data_pipeline_mode = pl.Buffered(tune["data_buffers"])

    # Grid: F-axis OUTER, d1-axis INNER -> coefficient block index (depends only
    # on the outer axis) is unchanged across inner steps => no redundant DMA.
    coef_spec = pl.BlockSpec((d0, 1, bF), lambda j, i: (0, 0, j))
    if data_pipeline_mode is None:
        data_spec = pl.BlockSpec((d0, bd1, bF), lambda j, i: (0, i, j))
    else:
        data_spec = pl.BlockSpec((d0, bd1, bF), lambda j, i: (0, i, j),
                                 pipeline_mode=data_pipeline_mode)
    out_spec = pl.BlockSpec((bd1, bF), lambda j, i: (i, j))

    # Honest advisory cost: data read once, coefficients fetched once per F
    # block change, output written once.
    bytes_accessed = (d0 * d1 * F * itemsize
                      + nF * d0 * F * coef_itemsize
                      + d1 * F * jnp.dtype(out_dtype).itemsize)

    return pl.pallas_call(
        _wsum_kernel,
        out_shape=jax.ShapeDtypeStruct((d1, F), out_dtype),
        grid=(nF, nd1),
        in_specs=[coef_spec, data_spec],
        out_specs=out_spec,
        compiler_params=pltpu.CompilerParams(
            dimension_semantics=("parallel", "parallel"),
            vmem_limit_bytes=tune["vmem_limit"],
        ),
        cost_estimate=pl.CostEstimate(
            flops=2 * d0 * d1 * F,
            transcendentals=0,
            bytes_accessed=bytes_accessed),
    )(cflat, data3)


def blender_profiles_times_forward(data, x_param):
    """Reproduces BlenderProfilesTimes.forward for 5-D `data`."""
    d0, d1, d2, d3, d4 = data.shape
    assert x_param.shape == (d0, 1, d2, d3, 1), x_param.shape
    F = d2 * d3 * d4

    # PyTorch type promotion: f32 softmax coefficients * data -> result dtype.
    out_dtype = jnp.result_type(jnp.float32, data.dtype)

    # Tiny parameter path: softmax over d0 + broadcast along d4, in plain JAX
    # (d0*F elements -- negligible next to the single data pass).
    coef = jax.nn.softmax(x_param.astype(jnp.float32), axis=0)       # (d0,1,d2,d3,1)
    cflat = jnp.broadcast_to(coef, (d0, 1, d2, d3, d4)).reshape(d0, 1, F)

    data3 = data.reshape(d0, d1, F)        # contiguous view, no extra HBM pass
    out2 = weighted_sum_pallas(data3, cflat, out_dtype)               # (d1, F)
    return out2.reshape(d1, d2, d3, d4)


def _reference(data, x_param):
    coef = jax.nn.softmax(x_param.astype(jnp.float32), axis=0)
    return jnp.sum(coef * data, axis=0)


if __name__ == "__main__":
    # data shape (d0, d1, d2, d3, d4); parameter shape (d0, 1, d2, d3, 1).
    d0, d1, d2, d3, d4 = 2, 4, 16, 8, 8

    key = jax.random.PRNGKey(0)
    k_data, k_x = jax.random.split(key)
    data = jax.random.normal(k_data, (d0, d1, d2, d3, d4), dtype=jnp.float32)
    # The PyTorch module initializes the parameter to ones (uniform softmax);
    # use a random parameter so the softmax-weighted sum is exercised
    # non-trivially.
    x_param = jax.random.normal(k_x, (d0, 1, d2, d3, 1), dtype=jnp.float32)

    out = blender_profiles_times_forward(data, x_param)
    out = jax.block_until_ready(out)

    ref = _reference(data, x_param)
    assert out.shape == (d1, d2, d3, d4), out.shape
    assert jnp.allclose(out, ref, atol=1e-5, rtol=1e-5), "mismatch vs JAX reference"

    print("KERNEL_OK")
</pallas_src>

<mosaic_0001>
module attributes {stable_mosaic.version = 11 : i64} {
  func.func @_wsum_kernel(%arg0: i32, %arg1: i32, %arg2: memref<2x1x1024xf32, #tpu.memory_space<vmem>>, %arg3: memref<2x4x1024xf32, #tpu.memory_space<vmem>>, %arg4: memref<4x1024xf32, #tpu.memory_space<vmem>>) attributes {dimension_semantics = [#tpu.dimension_semantics<parallel>, #tpu.dimension_semantics<parallel>], iteration_bounds = array<i64: 1, 1>, scalar_prefetch = 0 : i64, scratch_operands = 0 : i64, tpu.core_type = #tpu.core_type<tc>, window_params = [{transform_indices = @transform_0, window_bounds = array<i64: 2, 1, 1024>}, {transform_indices = @transform_1, window_bounds = array<i64: 2, 4, 1024>}, {transform_indices = @transform_2, window_bounds = array<i64: 4, 1024>}]} {
    %c0 = arith.constant 0 : index
    %c0_0 = arith.constant 0 : index
    %c0_1 = arith.constant 0 : index
    %0 = vector.load %arg2[%c0, %c0_0, %c0_1] : memref<2x1x1024xf32, #tpu.memory_space<vmem>>, vector<1x1x1024xf32>
    %1 = vector.shape_cast %0 : vector<1x1x1024xf32> to vector<1x1024xf32>
    %c0_2 = arith.constant 0 : index
    %c0_3 = arith.constant 0 : index
    %c0_4 = arith.constant 0 : index
    %2 = vector.load %arg3[%c0_2, %c0_3, %c0_4] : memref<2x4x1024xf32, #tpu.memory_space<vmem>>, vector<1x4x1024xf32>
    %3 = vector.shape_cast %2 : vector<1x4x1024xf32> to vector<4x1024xf32>
    %4 = vector.broadcast %1 : vector<1x1024xf32> to vector<4x1024xf32>
    %5 = arith.mulf %4, %3 : vector<4x1024xf32>
    %c1 = arith.constant 1 : index
    %c0_5 = arith.constant 0 : index
    %c0_6 = arith.constant 0 : index
    %6 = vector.load %arg2[%c1, %c0_5, %c0_6] : memref<2x1x1024xf32, #tpu.memory_space<vmem>>, vector<1x1x1024xf32>
    %7 = vector.shape_cast %6 : vector<1x1x1024xf32> to vector<1x1024xf32>
    %c1_7 = arith.constant 1 : index
    %c0_8 = arith.constant 0 : index
    %c0_9 = arith.constant 0 : index
    %8 = vector.load %arg3[%c1_7, %c0_8, %c0_9] : memref<2x4x1024xf32, #tpu.memory_space<vmem>>, vector<1x4x1024xf32>
    %9 = vector.shape_cast %8 : vector<1x4x1024xf32> to vector<4x1024xf32>
    %10 = vector.broadcast %7 : vector<1x1024xf32> to vector<4x1024xf32>
    %11 = arith.mulf %10, %9 : vector<4x1024xf32>
    %12 = arith.addf %5, %11 : vector<4x1024xf32>
    %c0_10 = arith.constant 0 : index
    %c0_11 = arith.constant 0 : index
    %13 = vector.load %arg4[%c0_10, %c0_11] : memref<4x1024xf32, #tpu.memory_space<vmem>>, vector<4x1024xf32>
    tpu.vector_store %arg4[%c0_10, %c0_11], %12 {strides = array<i32>} : memref<4x1024xf32, #tpu.memory_space<vmem>>, vector<4x1024xf32>,
    return
  }
  func.func @transform_0(%arg0: i32, %arg1: i32) -> (i32, i32, i32) {
    %c0_i32 = arith.constant 0 : i32
    %c0_i32_0 = arith.constant 0 : i32
    %c0_i32_1 = arith.constant 0 : i32
    return %c0_i32, %c0_i32_0, %arg0 : i32, i32, i32
  }
  func.func @transform_1(%arg0: i32, %arg1: i32) -> (i32, i32, i32) {
    %c0_i32 = arith.constant 0 : i32
    %c0_i32_0 = arith.constant 0 : i32
    return %c0_i32, %arg1, %arg0 : i32, i32, i32
  }
  func.func @transform_2(%arg0: i32, %arg1: i32) -> (i32, i32) {
    %c0_i32 = arith.constant 0 : i32
    return %arg1, %arg0 : i32, i32
  }
}

</mosaic_0001>

<llo_original>
// kernel: tpu_custom_call.1
$region0: #{tpu_custom_call.1}
  #allocation0 [shape = 'u32[]', space=smem, size = 0x4, offset = 0x4, fixed_abs, tag = 'smem constant byte address 0x4 - core index']
  #allocation1 [shape = 'u32[144,128]{1,0:T(1,128)}', space=vmem, size = 0x12000, scoped, tag = 'internal scratch']
  %s0 = inlined_call_operand.hbm [shape: f32[2,1,1024], index: 0, kind: input, shape index: {}]
  %s1 = inlined_call_operand.hbm [shape: f32[2,4,1024], index: 1, kind: input, shape index: {}]
  %s2 = inlined_call_operand.hbm [shape: f32[4,1024], index: 2, kind: output, shape index: {}]
  %s3 = sld [smem:[#allocation0]]
  $region26: #{tpu_custom_call.1} parent=0
    _
  %s5 = ssub.s32 1, %s3
  %s6 = scalar_select 0, %s5, %s3
  $region1: #{tpu_custom_call.1} parent=0
    #allocation2 [shape = 'u8[8192]{0}', space=vmem, size = 0x2000, scoped, tag = 'input window, operand 0, single buffered']
    #allocation3 [shape = 's32[1]{0}', space=sflag, size = 0x4, scoped, tag = 'scoped memory for tpu_custom_call.1']
    #allocation4 [shape = 's32[1]{0}', space=sflag, size = 0x4, scoped, tag = 'scoped memory for tpu_custom_call.1']
    #allocation5 [shape = 'u8[32768]{0}', space=vmem, size = 0x8000, scoped, tag = 'input window, operand 1, single buffered']
    #allocation6 [shape = 's32[1]{0}', space=sflag, size = 0x4, scoped, tag = 'scoped memory for tpu_custom_call.1']
    #allocation7 [shape = 'u8[16384]{0}', space=vmem, size = 0x4000, scoped, tag = 'output window, operand 0, single buffered']
    %7 = vsyncpa [#allocation3], 0
    %8 = vsyncpa [#allocation6], 0
    %9 = vsyncpa [#allocation4], 0
    // Predicated region
    $region2: #{tpu_custom_call.1} parent=1 // pred_check
      _
    $region3: #{tpu_custom_call.1} parent=1 // pred_check_branch
      %11 = sbr.rel (0) target = $region5
    $region4: #{tpu_custom_call.1} parent=1 // pred_region
      %s13 = ssub.s32 256, 256
      %14 = vsyncadd [#allocation3], %s13
      %s15 = sshll.u32 [#allocation2], 4
      %s16 = int_to_ptr.vmem [resolvable:$true] %s15
      %21 = dma.hbm_to_vmem [thread:$0]  %s0, 256, %s16, [#allocation3], 128, 128, 8
    $region5: #{tpu_custom_call.1} parent=1 // pred_fallthru
      _
    // Predicated region
    $region6: #{tpu_custom_call.1} parent=1 // pred_check
      _
    $region7: #{tpu_custom_call.1} parent=1 // pred_check_branch
      %23 = sbr.rel (0) target = $region9
    $region8: #{tpu_custom_call.1} parent=1 // pred_region
      %s25 = ssub.s32 1024, 1024
      %26 = vsyncadd [#allocation6], %s25
      %s27 = sshll.u32 [#allocation5], 4
      %s28 = int_to_ptr.vmem [resolvable:$true] %s27
      %33 = dma.hbm_to_vmem [thread:$0]  %s1, 1024, %s28, [#allocation6], 512, 512, 32
    $region9: #{tpu_custom_call.1} parent=1 // pred_fallthru
      _
    // Predicated region
    $region10: #{tpu_custom_call.1} parent=1 // pred_check
      _
    $region11: #{tpu_custom_call.1} parent=1 // pred_check_branch
      %35 = sbr.rel (0) target = $region13
    $region12: #{tpu_custom_call.1} parent=1 // pred_region
      %36 = dma.done [#allocation3], 256
    $region13: #{tpu_custom_call.1} parent=1 // pred_fallthru
      _
    // Predicated region
    $region14: #{tpu_custom_call.1} parent=1 // pred_check
      _
    $region15: #{tpu_custom_call.1} parent=1 // pred_check_branch
      %38 = sbr.rel (0) target = $region17
    $region16: #{tpu_custom_call.1} parent=1 // pred_region
      %39 = dma.done [#allocation6], 1024
    $region17: #{tpu_custom_call.1} parent=1 // pred_fallthru
      _
    %v40 = vld [vmem:[#allocation2] sm:$0xff]
    %v41 = vld [vmem:[#allocation5] sm:$0xff]
    %v42 = vld [vmem:[#allocation5 + $0x8] sm:$0xff]
    %v43 = vld [vmem:[#allocation5 + $0x10] sm:$0xff]
    %v44 = vld [vmem:[#allocation5 + $0x18] sm:$0xff]
    %v46 = vlaneseq
    %v47 = vshrl.u32 %v46, 7
    %v48 = vsub.s32 0, %v47
    %v49 = vrot.slane %v40, %v48
    %v50 = vlaneseq
    %v51 = vshrl.u32 %v50, 7
    %v52 = vsub.s32 1, %v51
    %v53 = vrot.slane %v40, %v52
    %v54 = vlaneseq
    %v55 = vshrl.u32 %v54, 7
    %v56 = vsub.s32 2, %v55
    %v57 = vrot.slane %v40, %v56
    %v58 = vlaneseq
    %v59 = vshrl.u32 %v58, 7
    %v60 = vsub.s32 3, %v59
    %v61 = vrot.slane %v40, %v60
    %v62 = vlaneseq
    %v63 = vshrl.u32 %v62, 7
    %v64 = vsub.s32 4, %v63
    %v65 = vrot.slane %v40, %v64
    %v66 = vlaneseq
    %v67 = vshrl.u32 %v66, 7
    %v68 = vsub.s32 5, %v67
    %v69 = vrot.slane %v40, %v68
    %v70 = vlaneseq
    %v71 = vshrl.u32 %v70, 7
    %v72 = vsub.s32 6, %v71
    %v73 = vrot.slane %v40, %v72
    %v74 = vlaneseq
    %v75 = vshrl.u32 %v74, 7
    %v76 = vsub.s32 7, %v75
    %v77 = vrot.slane %v40, %v76
    %v90 = vcombine.high %v41, %v41
    %v91 = vcombine.high %v42, %v42
    %v92 = vcombine.high %v43, %v43
    %v93 = vcombine.high %v44, %v44
    %v98 = vmul.f32 %v49, %v41
    %v99 = vmul.f32 %v53, %v90
    %v100 = vmul.f32 %v57, %v42
    %v101 = vmul.f32 %v61, %v91
    %v102 = vmul.f32 %v65, %v43
    %v103 = vmul.f32 %v69, %v92
    %v104 = vmul.f32 %v73, %v44
    %v105 = vmul.f32 %v77, %v93
    %s106 = scalar_lea.vmem [#allocation2], 8
    %v107 = vld [vmem:[%s106] sm:$0xff]
    %s108 = scalar_lea.vmem [#allocation5], 32
    %v109 = vld [vmem:[%s108] sm:$0xff]
    %v110 = vld [vmem:[%s108 + $0x8] sm:$0xff]
    %v111 = vld [vmem:[%s108 + $0x10] sm:$0xff]
    %v112 = vld [vmem:[%s108 + $0x18] sm:$0xff]
    %v114 = vlaneseq
    %v115 = vshrl.u32 %v114, 7
    %v116 = vsub.s32 0, %v115
    %v117 = vrot.slane %v107, %v116
    %v118 = vlaneseq
    %v119 = vshrl.u32 %v118, 7
    %v120 = vsub.s32 1, %v119
    %v121 = vrot.slane %v107, %v120
    %v122 = vlaneseq
    %v123 = vshrl.u32 %v122, 7
    %v124 = vsub.s32 2, %v123
    %v125 = vrot.slane %v107, %v124
    %v126 = vlaneseq
    %v127 = vshrl.u32 %v126, 7
    %v128 = vsub.s32 3, %v127
    %v129 = vrot.slane %v107, %v128
    %v130 = vlaneseq
    %v131 = vshrl.u32 %v130, 7
    %v132 = vsub.s32 4, %v131
    %v133 = vrot.slane %v107, %v132
    %v134 = vlaneseq
    %v135 = vshrl.u32 %v134, 7
    %v136 = vsub.s32 5, %v135
    %v137 = vrot.slane %v107, %v136
    %v138 = vlaneseq
    %v139 = vshrl.u32 %v138, 7
    %v140 = vsub.s32 6, %v139
    %v141 = vrot.slane %v107, %v140
    %v142 = vlaneseq
    %v143 = vshrl.u32 %v142, 7
    %v144 = vsub.s32 7, %v143
    %v145 = vrot.slane %v107, %v144
    %v158 = vcombine.high %v109, %v109
    %v159 = vcombine.high %v110, %v110
    %v160 = vcombine.high %v111, %v111
    %v161 = vcombine.high %v112, %v112
    %v166 = vmul.f32 %v117, %v109
    %v167 = vmul.f32 %v121, %v158
    %v168 = vmul.f32 %v125, %v110
    %v169 = vmul.f32 %v129, %v159
    %v170 = vmul.f32 %v133, %v111
    %v171 = vmul.f32 %v137, %v160
    %v172 = vmul.f32 %v141, %v112
    %v173 = vmul.f32 %v145, %v161
    %v174 = vadd.f32 %v98, %v166
    %v175 = vadd.f32 %v99, %v167
    %v176 = vadd.f32 %v100, %v168
    %v177 = vadd.f32 %v101, %v169
    %v178 = vadd.f32 %v102, %v170
    %v179 = vadd.f32 %v103, %v171
    %v180 = vadd.f32 %v104, %v172
    %v181 = vadd.f32 %v105, %v173
    %v190 = vcombine.low %v174, %v175
    %v191 = vcombine.low %v176, %v177
    %v192 = vcombine.low %v178, %v179
    %v193 = vcombine.low %v180, %v181
    %198 = vst [vmem:[#allocation7] sm:$0xff] %v190
    %199 = vst [vmem:[#allocation7 + $0x8] sm:$0xff] %v191
    %200 = vst [vmem:[#allocation7 + $0x10] sm:$0xff] %v192
    %201 = vst [vmem:[#allocation7 + $0x18] sm:$0xff] %v193
    // Predicated region
    $region18: #{tpu_custom_call.1} parent=1 // pred_check
      _
    $region19: #{tpu_custom_call.1} parent=1 // pred_check_branch
      %203 = sbr.rel (0) target = $region21
    $region20: #{tpu_custom_call.1} parent=1 // pred_region
      %s205 = ssub.s32 512, 512
      %206 = vsyncadd [#allocation4], %s205
      %s208 = sshll.u32 [#allocation7], 4
      %s209 = int_to_ptr.vmem [resolvable:$true] %s208
      %211 = dma.vmem_to_hbm [thread:$0]  %s209, 512, %s2, [#allocation4]
    $region21: #{tpu_custom_call.1} parent=1 // pred_fallthru
      _
    // Predicated region
    $region22: #{tpu_custom_call.1} parent=1 // pred_check
      _
    $region23: #{tpu_custom_call.1} parent=1 // pred_check_branch
      %213 = sbr.rel (0) target = $region25
    $region24: #{tpu_custom_call.1} parent=1 // pred_region
      %214 = dma.done [#allocation4], 512
    $region25: #{tpu_custom_call.1} parent=1 // pred_fallthru
      _
    %215 = vsyncpa [#allocation3], 1
    %216 = vsyncpa [#allocation6], 1
    %217 = vsyncpa [#allocation4], 1

</llo_original>
